<compile_context>
chip_gen: v6e
topology: v6e:2x2x1
jax: 0.10.0
libtpu: 0.0.40
codegen_flags: <defaults>
</compile_context>

<pallas_src>
import functools
import math

import jax
import jax.numpy as jnp
from jax.experimental import pallas as pl
from jax.experimental.pallas import tpu as pltpu

PAD_TOKEN_ID = 1
EOS_TOKEN_IDS = (2,)
INVALID_FILL_INDEX = 5   # InvalidScoreLogitsProcessor sets scores[..., 5] = 50000


# -----------------------------------------------------------------------------
# Kernel 1: synthetic decoder cross-attention for the LAST query position only.
# Runs once per decode step (grid=(1,)) and is NOT inside the vocab stream, so
# the (B,T,H) encoder states never occupy VMEM during the LM-head loop.
# -----------------------------------------------------------------------------
def _cross_attn_last_kernel(emb_ref, enc_ref, h_ref):
    emb = emb_ref[...]                                    # (B, 1, H) bf16
    enc = enc_ref[...]                                    # (B, T, H) bf16
    h_dim = emb.shape[-1]
    scores = jnp.einsum("bqh,bth->bqt", emb, enc,
                        preferred_element_type=jnp.float32)
    scores = scores * (1.0 / math.sqrt(h_dim))            # (B, 1, T) f32
    m = jnp.max(scores, axis=-1, keepdims=True)
    e = jnp.exp(scores - m)
    p = e / jnp.sum(e, axis=-1, keepdims=True)            # exact divide (runs once)
    ctx = jnp.einsum("bqt,bth->bqh", p.astype(jnp.bfloat16), enc,
                     preferred_element_type=jnp.float32)
    h = emb.astype(jnp.float32) + ctx                     # (B, 1, H) f32
    h_ref[...] = h[:, 0, :]


def cross_attention_last(emb_last, enc):
    """emb_last: (B,1,H) bf16, enc: (B,T,H) bf16 -> (B,H) f32 last hidden."""
    B, q, H = emb_last.shape
    assert q == 1
    T = enc.shape[1]
    return pl.pallas_call(
        _cross_attn_last_kernel,
        grid=(1,),
        in_specs=[pl.BlockSpec((B, 1, H), lambda i: (0, 0, 0)),
                  pl.BlockSpec((B, T, H), lambda i: (0, 0, 0))],
        out_specs=pl.BlockSpec((B, H), lambda i: (0, 0)),
        out_shape=jax.ShapeDtypeStruct((B, H), jnp.float32),
        compiler_params=pltpu.CompilerParams(
            dimension_semantics=("arbitrary",)),
    )(emb_last, enc)


# -----------------------------------------------------------------------------
# Kernel 2: streaming LM head + online (max, first-argmax, invalid) accumulator.
# grid = (core_split [parallel], vocab tile [arbitrary / reduction]).
# Accumulators live in the per-core resident output blocks (no scratch).
# -----------------------------------------------------------------------------
def _lm_head_argmax_kernel(h_ref, w_ref, max_ref, arg_ref, inv_ref, *, v_real):
    c = pl.program_id(0)
    v = pl.program_id(1)
    nv_per_core = pl.num_programs(1)
    tile_v = w_ref.shape[2]

    @pl.when(v == 0)
    def _init():
        max_ref[...] = jnp.full(max_ref.shape, -jnp.inf, max_ref.dtype)
        arg_ref[...] = jnp.zeros(arg_ref.shape, arg_ref.dtype)
        inv_ref[...] = jnp.zeros(inv_ref.shape, inv_ref.dtype)

    # LM head for this vocab tile: bf16 operands on the MXU, f32 accumulation.
    logits = jnp.dot(h_ref[...], w_ref[0],
                     preferred_element_type=jnp.float32)          # (B, tile_v)

    tile_start = (c * nv_per_core + v) * tile_v
    gcol = jax.lax.broadcasted_iota(jnp.int32, logits.shape, 1) + tile_start
    valid = gcol < v_real                                          # mask pad cols

    # Running nan/inf flag (InvalidScoreLogitsProcessor), real columns only.
    # NOTE: detection runs on the bf16-operand / f32-accumulate path, so an
    # overflow created (or hidden) by the bf16 cast can differ from torch f32.
    bad = jnp.where(jnp.logical_and(valid, ~jnp.isfinite(logits)), 1.0, 0.0)
    inv_ref[0] = jnp.maximum(inv_ref[0], jnp.max(bad, axis=-1, keepdims=True))

    # Running (max, first-max argmax). Padded columns are -inf so never win.
    logits_m = jnp.where(valid, logits, -jnp.inf)
    tmax = jnp.max(logits_m, axis=-1, keepdims=True)               # (B, 1)
    targ = jnp.min(jnp.where(logits_m == tmax, gcol, jnp.int32(2 ** 30)),
                   axis=-1, keepdims=True)                         # global col idx
    # Strict ">" keeps the FIRST (lowest-index) max; a NaN tile max compares
    # False so NaN tiles are skipped here -- torch parity is preserved only
    # because the invalid flag then forces token 5 (keep these coupled!).
    better = tmax > max_ref[0]
    arg_ref[0] = jnp.where(better, targ, arg_ref[0])
    max_ref[0] = jnp.where(better, tmax, max_ref[0])


def _vmem_capacity_bytes():
    try:
        return int(pltpu.get_tpu_info().vmem_capacity_bytes)
    except Exception:
        return 64 * 1024 * 1024          # conservative (v7x-sized) fallback


def _default_num_core_splits():
    try:
        info = pltpu.get_tpu_info()
        for attr in ("num_cores", "core_count", "num_tensorcores"):
            n = getattr(info, attr, None)
            if isinstance(n, int) and n >= 1:
                return max(1, min(int(n), 2))
    except Exception:
        pass
    # v7x has 2 TensorCores (megacore-sharded "parallel" axis); on 1-TC chips
    # an extra split just runs serially with a trivial wrapper combine.
    return 2


def _pick_tile_v(V, H, num_splits, num_buffers, vmem_limit):
    """Biggest 128-multiple weight tile the buffered pipeline fits in VMEM."""
    budget = max(vmem_limit - 4 * 1024 * 1024, 2 * 1024 * 1024)
    per_col_bytes = num_buffers * 2 * H            # bf16 weight columns x buffers
    tile_v = (budget // per_col_bytes) // 128 * 128
    per_core = -(-V // num_splits)                 # one core's vocab share
    per_core_128 = -(-per_core // 128) * 128       # bounds padding waste
    return int(max(128, min(tile_v, per_core_128)))


def lm_head_argmax(h_bf16, w_lm_bf16, *, tile_v=None, num_core_splits=None):
    """Streaming LM head + argmax + nan/inf flag; never materializes (B, V)."""
    B, H = h_bf16.shape
    V = w_lm_bf16.shape[1]

    if num_core_splits is None:
        num_core_splits = _default_num_core_splits()
    vmem_cap = _vmem_capacity_bytes()
    vmem_limit = min((vmem_cap * 3) // 4, 112 * 1024 * 1024)   # ~96MiB v5e/v6e, ~48MiB v7x
    num_buffers = 3 if vmem_cap >= 96 * 1024 * 1024 else 2
    if tile_v is None:
        tile_v = _pick_tile_v(V, H, num_core_splits, num_buffers, vmem_limit)
    assert tile_v % 128 == 0

    nv_per_core = -(-V // (tile_v * num_core_splits))
    nv_total = nv_per_core * num_core_splits
    v_pad = nv_total * tile_v

    # Re-layout to tile-major (nv_total, H, tile_v): each streamed tile is one
    # contiguous DMA burst instead of H strided runs of tile_v columns.
    # TODO(synk): in a real generation loop do this re-layout (and the bf16
    # cast) once at model-load time, not per decode step.
    w = w_lm_bf16 if v_pad == V else jnp.pad(w_lm_bf16, ((0, 0), (0, v_pad - V)))
    w_tiles = w.reshape(H, nv_total, tile_v).transpose(1, 0, 2)

    def w_index(c, v):
        return (c * nv_per_core + v, 0, 0)

    try:
        w_spec = pl.BlockSpec((1, H, tile_v), w_index,
                              pipeline_mode=pl.Buffered(num_buffers))
    except (TypeError, AttributeError):   # fall back to default double-buffer
        w_spec = pl.BlockSpec((1, H, tile_v), w_index)

    kernel = functools.partial(_lm_head_argmax_kernel, v_real=V)

    part_max, part_arg, part_inv = pl.pallas_call(
        kernel,
        grid=(num_core_splits, nv_per_core),
        in_specs=[
            pl.BlockSpec((B, H), lambda c, v: (0, 0)),   # resident bf16 hidden
            w_spec,                                      # streamed weight tile
        ],
        out_specs=(
            pl.BlockSpec((1, B, 1), lambda c, v: (c, 0, 0)),
            pl.BlockSpec((1, B, 1), lambda c, v: (c, 0, 0)),
            pl.BlockSpec((1, B, 1), lambda c, v: (c, 0, 0)),
        ),
        out_shape=(
            jax.ShapeDtypeStruct((num_core_splits, B, 1), jnp.float32),
            jax.ShapeDtypeStruct((num_core_splits, B, 1), jnp.int32),
            jax.ShapeDtypeStruct((num_core_splits, B, 1), jnp.float32),
        ),
        compiler_params=pltpu.CompilerParams(
            dimension_semantics=("parallel", "arbitrary"),
            vmem_limit_bytes=int(vmem_limit),
        ),
        cost_estimate=pl.CostEstimate(
            flops=int(2 * B * H * v_pad),
            transcendentals=0,
            bytes_accessed=int(2 * H * v_pad + 2 * B * H + 12 * num_core_splits * B),
        ),
    )(h_bf16, w_tiles)

    # Combine per-core partials (core 0 owns the lower vocab indices, so a
    # strict ">" scan preserves torch's first-max tie-break).
    best_max = part_max[0, :, 0]
    best_arg = part_arg[0, :, 0]
    for c in range(1, num_core_splits):
        better = part_max[c, :, 0] > best_max
        best_arg = jnp.where(better, part_arg[c, :, 0], best_arg)
        best_max = jnp.where(better, part_max[c, :, 0], best_max)

    # InvalidScoreLogitsProcessor: ANY nan/inf -> scores zeroed, [...,5]=50000,
    # so every row's argmax becomes 5.
    invalid = jnp.max(part_inv) > 0.0
    return jnp.where(invalid, jnp.int32(INVALID_FILL_INDEX), best_arg)


# -----------------------------------------------------------------------------
# ChatTokenModel.forward (one greedy decode step)
# -----------------------------------------------------------------------------
def chat_token_forward(input_ids, prepare_input_ids, encoder_hidden_states,
                       attention_mask, unfinished_sequence,
                       embed_table, w_lm, max_length=2560,
                       tile_v=None, num_core_splits=None):
    B = input_ids.shape[0]

    # Only the last query position feeds the LM head (positions are independent
    # in the synthetic single-cross-attn decoder), so gather just that row.
    # TODO(synk): fuse this gather into the kernel (PrefetchScalarGridSpec +
    # pl.Element row gather) for a real-vocab embedding table.
    last_ids = prepare_input_ids[:, -1]
    emb_last = embed_table[last_ids].astype(jnp.bfloat16)[:, None, :]   # (B,1,H)

    hidden = cross_attention_last(
        emb_last, encoder_hidden_states.astype(jnp.bfloat16))           # (B,H) f32
    h_bf16 = hidden.astype(jnp.bfloat16)                                # cast once

    next_tokens = lm_head_argmax(h_bf16, w_lm.astype(jnp.bfloat16),
                                 tile_v=tile_v,
                                 num_core_splits=num_core_splits)       # (B,) i32

    # next_tokens = next_tokens * unfinished + pad * (1 - unfinished)
    next_tokens = (next_tokens * unfinished_sequence
                   + PAD_TOKEN_ID * (1 - unfinished_sequence))

    input_ids = jnp.concatenate([input_ids, next_tokens[:, None]], axis=-1)

    # _update_model_kwargs_for_generation: extend attention_mask, carry "past".
    attention_mask = jnp.concatenate(
        [attention_mask, jnp.ones((B, 1), attention_mask.dtype)], axis=-1)
    # TODO(synk): a real decoder would return per-layer K/V caches; the
    # synthetic decoder's last hidden state stands in for past_key_values.
    past_key_values = [[hidden, hidden]]

    # unfinished_sequence *= prod over eos ids of (next_tokens != eos)
    not_eos = jnp.ones_like(next_tokens)
    for eos in EOS_TOKEN_IDS:
        not_eos = not_eos * (next_tokens != eos).astype(next_tokens.dtype)
    unfinished_sequence = unfinished_sequence * not_eos

    # stopping criteria (eos stop merged with static max-length check)
    eos_stop = jnp.where(jnp.max(unfinished_sequence) == 0,
                         jnp.float32(1.0), jnp.float32(0.0))
    max_len_hit = input_ids.shape[-1] >= max_length            # static at trace time
    this_peer_finished = (jnp.ones((1,), jnp.float32) if max_len_hit
                          else jnp.full((1,), eos_stop, jnp.float32))

    return (this_peer_finished, input_ids, attention_mask,
            unfinished_sequence, past_key_values)


if __name__ == "__main__":
    # Small shapes: batch=2, seq=8, hidden=32, vocab=256 (multiple 128-wide
    # tiles so the online vocab accumulator + core-split paths are exercised).
    B, L, S, T, H, V = 2, 8, 8, 8, 32, 256

    key = jax.random.PRNGKey(0)
    k_emb, k_lm, k_enc, k_ids, k_prep = jax.random.split(key, 5)

    embed_table = jax.random.normal(k_emb, (V, H), jnp.float32) * 0.1
    w_lm = jax.random.normal(k_lm, (H, V), jnp.float32) * 0.1

    input_ids = jax.random.randint(k_ids, (B, L), 0, V, jnp.int32)
    prepare_input_ids = jax.random.randint(k_prep, (B, S), 0, V, jnp.int32)
    encoder_hidden_states = jax.random.normal(k_enc, (B, T, H), jnp.float32)
    attention_mask = jnp.ones((B, L), jnp.int32)
    unfinished_sequence = jnp.ones((B,), jnp.int32)

    out = chat_token_forward(input_ids, prepare_input_ids, encoder_hidden_states,
                             attention_mask, unfinished_sequence,
                             embed_table, w_lm, max_length=2560)
    jax.block_until_ready(out)

    this_peer_finished, new_ids, new_mask, new_unfinished, past = out
    assert new_ids.shape == (B, L + 1)
    assert new_mask.shape == (B, L + 1)
    assert new_unfinished.shape == (B,)
    assert this_peer_finished.shape == (1,)
    assert past[0][0].shape == (B, H)
    assert bool(jnp.all((new_ids[:, -1] >= 0) & (new_ids[:, -1] < V)))
    print("KERNEL_OK")
</pallas_src>

<mosaic_0001>
module attributes {stable_mosaic.version = 11 : i64} {
  func.func @_cross_attn_last_kernel(%arg0: i32, %arg1: memref<2x1x32xbf16, #tpu.memory_space<vmem>>, %arg2: memref<2x8x32xbf16, #tpu.memory_space<vmem>>, %arg3: memref<2x32xf32, #tpu.memory_space<vmem>>) attributes {dimension_semantics = [#tpu.dimension_semantics<arbitrary>], iteration_bounds = array<i64: 1>, scalar_prefetch = 0 : i64, scratch_operands = 0 : i64, tpu.core_type = #tpu.core_type<tc>, window_params = [{pipeline_mode = #tpu.pipeline_mode<synchronous>, transform_indices = @transform_0, window_bounds = array<i64: 2, 1, 32>}, {pipeline_mode = #tpu.pipeline_mode<synchronous>, transform_indices = @transform_1, window_bounds = array<i64: 2, 8, 32>}, {pipeline_mode = #tpu.pipeline_mode<synchronous>, transform_indices = @transform_2, window_bounds = array<i64: 2, 32>}]} {
    %c0 = arith.constant 0 : index
    %c0_0 = arith.constant 0 : index
    %c0_1 = arith.constant 0 : index
    %0 = vector.load %arg1[%c0, %c0_0, %c0_1] : memref<2x1x32xbf16, #tpu.memory_space<vmem>>, vector<2x1x32xbf16>
    %c0_2 = arith.constant 0 : index
    %c0_3 = arith.constant 0 : index
    %c0_4 = arith.constant 0 : index
    %1 = vector.load %arg2[%c0_2, %c0_3, %c0_4] : memref<2x8x32xbf16, #tpu.memory_space<vmem>>, vector<2x8x32xbf16>
    "tpu.trace_start"() <{level = 10 : i32, message = "bqh,bth->bqt"}> : () -> ()
    %cst = arith.constant dense<0.000000e+00> : vector<2x1x8xf32>
    %2 = tpu.matmul %0, %1, %cst {dimension_numbers = #tpu.dot_dimension_numbers<[2], [2], [1], [1], [0, 0, 0, 1, 1, 1], [0], [0]>} : vector<2x1x32xbf16>, vector<2x8x32xbf16>, vector<2x1x8xf32> -> vector<2x1x8xf32>
    "tpu.trace_stop"() : () -> ()
    %cst_5 = arith.constant 0.176776692 : f32
    %3 = vector.broadcast %cst_5 : f32 to vector<2x1x8xf32>
    %4 = arith.mulf %2, %3 : vector<2x1x8xf32>
    %cst_6 = arith.constant dense<0xFF800000> : vector<2x1xf32>
    %5 = vector.multi_reduction <maximumf>, %4, %cst_6 [2] : vector<2x1x8xf32> to vector<2x1xf32>
    %6 = vector.shape_cast %5 : vector<2x1xf32> to vector<2x1x1xf32>
    %7 = vector.broadcast %6 : vector<2x1x1xf32> to vector<2x1x8xf32>
    %8 = arith.subf %4, %7 : vector<2x1x8xf32>
    %9 = math.exp %8 : vector<2x1x8xf32>
    %cst_7 = arith.constant dense<0.000000e+00> : vector<2x1xf32>
    %10 = vector.multi_reduction <add>, %9, %cst_7 [2] : vector<2x1x8xf32> to vector<2x1xf32>
    %11 = vector.shape_cast %10 : vector<2x1xf32> to vector<2x1x1xf32>
    %12 = vector.broadcast %11 : vector<2x1x1xf32> to vector<2x1x8xf32>
    %13 = arith.divf %9, %12 : vector<2x1x8xf32>
    %14 = arith.truncf %13 : vector<2x1x8xf32> to vector<2x1x8xbf16>
    "tpu.trace_start"() <{level = 10 : i32, message = "bqt,bth->bqh"}> : () -> ()
    %cst_8 = arith.constant dense<0.000000e+00> : vector<2x1x32xf32>
    %15 = tpu.matmul %14, %1, %cst_8 {dimension_numbers = #tpu.dot_dimension_numbers<[2], [1], [1], [2], [0, 0, 0, 1, 1, 2], [0], [0]>} : vector<2x1x8xbf16>, vector<2x8x32xbf16>, vector<2x1x32xf32> -> vector<2x1x32xf32>
    "tpu.trace_stop"() : () -> ()
    %16 = arith.extf %0 : vector<2x1x32xbf16> to vector<2x1x32xf32>
    %17 = arith.addf %16, %15 : vector<2x1x32xf32>
    %18 = vector.shape_cast %17 : vector<2x1x32xf32> to vector<2x32xf32>
    %c0_9 = arith.constant 0 : index
    %c0_10 = arith.constant 0 : index
    %19 = vector.load %arg3[%c0_9, %c0_10] : memref<2x32xf32, #tpu.memory_space<vmem>>, vector<2x32xf32>
    tpu.vector_store %arg3[%c0_9, %c0_10], %18 {strides = array<i32>} : memref<2x32xf32, #tpu.memory_space<vmem>>, vector<2x32xf32>,
    return
  }
  func.func @transform_0(%arg0: i32) -> (i32, i32, i32) {
    %c0_i32 = arith.constant 0 : i32
    %c0_i32_0 = arith.constant 0 : i32
    %c0_i32_1 = arith.constant 0 : i32
    %c0_i32_2 = arith.constant 0 : i32
    return %c0_i32, %c0_i32_0, %c0_i32_1 : i32, i32, i32
  }
  func.func @transform_1(%arg0: i32) -> (i32, i32, i32) {
    %c0_i32 = arith.constant 0 : i32
    %c0_i32_0 = arith.constant 0 : i32
    %c0_i32_1 = arith.constant 0 : i32
    %c0_i32_2 = arith.constant 0 : i32
    return %c0_i32, %c0_i32_0, %c0_i32_1 : i32, i32, i32
  }
  func.func @transform_2(%arg0: i32) -> (i32, i32) {
    %c0_i32 = arith.constant 0 : i32
    %c0_i32_0 = arith.constant 0 : i32
    %c0_i32_1 = arith.constant 0 : i32
    return %c0_i32, %c0_i32_0 : i32, i32
  }
}

</mosaic_0001>

<llo_original>
// kernel: tpu_custom_call.1
$region0: #{tpu_custom_call.1}
  #allocation0 [shape = 'u32[]', space=smem, size = 0x4, offset = 0x4, fixed_abs, tag = 'smem constant byte address 0x4 - core index']
  #allocation1 [shape = 'u32[144,128]{1,0:T(1,128)}', space=vmem, size = 0x12000, scoped, tag = 'internal scratch']
  %s0 = inlined_call_operand.vmem [shape: bf16[2,1,32], index: 0, kind: input, shape index: {}]
  %s1 = inlined_call_operand.hbm [shape: bf16[2,8,32], index: 1, kind: input, shape index: {}]
  %s2 = inlined_call_operand.hbm [shape: f32[2,32], index: 2, kind: output, shape index: {}]
  %s3 = sld [smem:[#allocation0]]
  $region22: #{tpu_custom_call.1} parent=0
    _
  %s5 = ssub.s32 1, %s3
  %s6 = scalar_select 0, %s5, %s3
  $region1: #{tpu_custom_call.1} parent=0
    #allocation2 [shape = 'u8[4096]{0}', space=vmem, size = 0x1000, scoped, tag = 'input window, operand 1, single buffered']
    #allocation3 [shape = 's32[1]{0}', space=sflag, size = 0x4, scoped, tag = 'scoped memory for tpu_custom_call.1']
    #allocation4 [shape = 's32[1]{0}', space=sflag, size = 0x4, scoped, tag = 'scoped memory for tpu_custom_call.1']
    #allocation5 [shape = 'u8[1024]{0}', space=vmem, size = 0x400, scoped, tag = 'output window, operand 0, single buffered']
    %7 = vsyncpa [#allocation3], 0
    %8 = vsyncpa [#allocation4], 0
    // Predicated region
    $region2: #{tpu_custom_call.1} parent=1 // pred_check
      _
    $region3: #{tpu_custom_call.1} parent=1 // pred_check_branch
      %10 = sbr.rel (0) target = $region5
    $region4: #{tpu_custom_call.1} parent=1 // pred_region
      _
    $region5: #{tpu_custom_call.1} parent=1 // pred_fallthru
      _
    // Predicated region
    $region6: #{tpu_custom_call.1} parent=1 // pred_check
      _
    $region7: #{tpu_custom_call.1} parent=1 // pred_check_branch
      %12 = sbr.rel (0) target = $region9
    $region8: #{tpu_custom_call.1} parent=1 // pred_region
      %s14 = ssub.s32 128, 128
      %15 = vsyncadd [#allocation3], %s14
      %s16 = sshll.u32 [#allocation2], 4
      %s17 = int_to_ptr.vmem [resolvable:$true] %s16
      %22 = dma.hbm_to_vmem [thread:$0]  %s1, 128, %s17, [#allocation3], 64, 64, 4
    $region9: #{tpu_custom_call.1} parent=1 // pred_fallthru
      _
    // Predicated region
    $region10: #{tpu_custom_call.1} parent=1 // pred_check
      _
    $region11: #{tpu_custom_call.1} parent=1 // pred_check_branch
      %24 = sbr.rel (0) target = $region13
    $region12: #{tpu_custom_call.1} parent=1 // pred_region
      %25 = dma.done [#allocation3], 128
    $region13: #{tpu_custom_call.1} parent=1 // pred_fallthru
      _
    %v27 = vld [vmem:[%s0] sm:$0x1]
    %v28 = vld [vmem:[%s0 + $0x1] sm:$0x1]
    %v29 = vld [vmem:[#allocation2] sm:$0xf]
    %v30 = vld [vmem:[#allocation2 + $0x4] sm:$0xf]
    %vm31 = vcmask 261120
    %v33 = vsel %vm31, %v27, 0
    %v36 = vsel %vm31, %v29, 0
    %38 = vmatprep.subr.bf16.mxu0 0
    %39 = vmatpush1.bf16.xpose.msra.mxu0 0
    %40 = vmatprep.subr.bf16.mxu0 0
    %41 = vmatpush1.bf16.xpose.msra.mxu0 0
    %42 = vmatprep.subr.bf16.mxu0 0
    %43 = vmatpush1.bf16.xpose.msra.mxu0 0
    %44 = vmatprep.subr.bf16.mxu0 0
    %45 = vmatpush1.bf16.xpose.msra.mxu0 0
    %46 = vmatprep.subr.bf16.mxu0 0
    %47 = vmatpush1.bf16.xpose.msra.mxu0 0
    %48 = vmatprep.subr.bf16.mxu0 0
    %49 = vmatpush1.bf16.xpose.msra.mxu0 0
    %50 = vmatprep.subr.bf16.mxu0 0
    %51 = vmatpush1.bf16.xpose.msra.mxu0 0
    %52 = vmatprep.subr.bf16.mxu0 0
    %53 = vmatpush1.bf16.xpose.msra.mxu0 %v36
    %54 = vmatprep.subr.bf16.mxu0 0
    %55 = vmatpush2.bf16.xpose.msra.mxu0 0
    %56 = vmatprep.subr.bf16.mxu0 0
    %57 = vmatpush2.bf16.xpose.msra.mxu0 0
    %58 = vmatprep.subr.bf16.mxu0 0
    %59 = vmatpush2.bf16.xpose.msra.mxu0 0
    %60 = vmatprep.subr.bf16.mxu0 0
    %61 = vmatpush2.bf16.xpose.msra.mxu0 0
    %62 = vmatprep.subr.bf16.mxu0 0
    %63 = vmatpush2.bf16.xpose.msra.mxu0 0
    %64 = vmatprep.subr.bf16.mxu0 0
    %65 = vmatpush2.bf16.xpose.msra.mxu0 0
    %66 = vmatprep.subr.bf16.mxu0 0
    %67 = vmatpush2.bf16.xpose.msra.mxu0 0
    %68 = vmatprep.subr.bf16.mxu0 0
    %69 = vmatpush2.bf16.xpose.msra.mxu0 0
    %70 = vmatprep.mubr.bf16.mxu0 0
    %71 = vmatmul.mubr.bf16.gmra.mxu0 %v33
    %v72 = vpop.f32.mrf.mxu0
    %v73 = vadd.f32 0.0, %v72
    %v74 = vpop.f32.mrf.mxu0
    %v75 = vpop.f32.mrf.mxu0
    %v76 = vpop.f32.mrf.mxu0
    %77 = vdwg.mxu0
    %v79 = vsel %vm31, %v28, 0
    %v82 = vsel %vm31, %v30, 0
    %84 = vmatprep.subr.bf16.mxu0 0
    %85 = vmatpush1.bf16.xpose.msra.mxu0 0
    %86 = vmatprep.subr.bf16.mxu0 0
    %87 = vmatpush1.bf16.xpose.msra.mxu0 0
    %88 = vmatprep.subr.bf16.mxu0 0
    %89 = vmatpush1.bf16.xpose.msra.mxu0 0
    %90 = vmatprep.subr.bf16.mxu0 0
    %91 = vmatpush1.bf16.xpose.msra.mxu0 0
    %92 = vmatprep.subr.bf16.mxu0 0
    %93 = vmatpush1.bf16.xpose.msra.mxu0 0
    %94 = vmatprep.subr.bf16.mxu0 0
    %95 = vmatpush1.bf16.xpose.msra.mxu0 0
    %96 = vmatprep.subr.bf16.mxu0 0
    %97 = vmatpush1.bf16.xpose.msra.mxu0 0
    %98 = vmatprep.subr.bf16.mxu0 0
    %99 = vmatpush1.bf16.xpose.msra.mxu0 %v82
    %100 = vmatprep.subr.bf16.mxu0 0
    %101 = vmatpush2.bf16.xpose.msra.mxu0 0
    %102 = vmatprep.subr.bf16.mxu0 0
    %103 = vmatpush2.bf16.xpose.msra.mxu0 0
    %104 = vmatprep.subr.bf16.mxu0 0
    %105 = vmatpush2.bf16.xpose.msra.mxu0 0
    %106 = vmatprep.subr.bf16.mxu0 0
    %107 = vmatpush2.bf16.xpose.msra.mxu0 0
    %108 = vmatprep.subr.bf16.mxu0 0
    %109 = vmatpush2.bf16.xpose.msra.mxu0 0
    %110 = vmatprep.subr.bf16.mxu0 0
    %111 = vmatpush2.bf16.xpose.msra.mxu0 0
    %112 = vmatprep.subr.bf16.mxu0 0
    %113 = vmatpush2.bf16.xpose.msra.mxu0 0
    %114 = vmatprep.subr.bf16.mxu0 0
    %115 = vmatpush2.bf16.xpose.msra.mxu0 0
    %116 = vmatprep.mubr.bf16.mxu0 0
    %117 = vmatmul.mubr.bf16.gmra.mxu0 %v79
    %v118 = vpop.f32.mrf.mxu0
    %v119 = vadd.f32 0.0, %v118
    %v120 = vpop.f32.mrf.mxu0
    %v121 = vpop.f32.mrf.mxu0
    %v122 = vpop.f32.mrf.mxu0
    %123 = vdwg.mxu0
    %v124 = vmul.f32 %v73, 0.17677669
    %v125 = vmul.f32 %v119, 0.17677669
    %vm126 = vcmask 57344
    %v127 = vsel %vm126, %v124, -inf
    %128 = vmax.xlane.f32.xlu0 %v127
    %v129 = vpop.xlane.xlu0 %128
    %v130 = vsel %vm126, %v125, -inf
    %131 = vmax.xlane.f32.xlu0 %v130
    %v132 = vpop.xlane.xlu0 %131
    %v133 = vsub.f32 %v124, %v129
    %v134 = vsub.f32 %v125, %v132
    %v135 = vmul.f32 %v133, 1.442695
    %v136 = vpow.pop %v135
    %v137 = vmul.f32 %v134, 1.442695
    %v138 = vpow.pop %v137
    %v139 = vsel %vm126, %v136, 0.0
    %140 = vadd.xlane.f32.xlu0 %v139
    %v141 = vpop.xlane.xlu0 %140
    %v142 = vsel %vm126, %v138, 0.0
    %143 = vadd.xlane.f32.xlu0 %v142
    %v144 = vpop.xlane.xlu0 %143
    %v145 = vrcp.pop %v141
    %v146 = vmul.f32 %v136, %v145
    %v147 = vrcp.pop %v144
    %v148 = vmul.f32 %v138, %v147
    %v149 = vpack.c.bf16 %v146, %v146
    %v150 = vpack.c.bf16 %v148, %v148
    %vm151 = vcmask 64512
    %v153 = vsel %vm151, %v149, 0
    %vm155 = vcmask 1043456
    %v156 = vsel %vm155, %v29, 0
    %158 = vmatprep.subr.bf16.mxu0 0
    %159 = vmatpush1.bf16.msra.mxu0 0
    %160 = vmatprep.subr.bf16.mxu0 0
    %161 = vmatpush1.bf16.msra.mxu0 0
    %162 = vmatprep.subr.bf16.mxu0 0
    %163 = vmatpush1.bf16.msra.mxu0 0
    %164 = vmatprep.subr.bf16.mxu0 0
    %165 = vmatpush1.bf16.msra.mxu0 0
    %166 = vmatprep.subr.bf16.mxu0 0
    %167 = vmatpush1.bf16.msra.mxu0 0
    %168 = vmatprep.subr.bf16.mxu0 0
    %169 = vmatpush1.bf16.msra.mxu0 0
    %170 = vmatprep.subr.bf16.mxu0 0
    %171 = vmatpush1.bf16.msra.mxu0 0
    %172 = vmatprep.subr.bf16.mxu0 0
    %173 = vmatpush1.bf16.msra.mxu0 %v156
    %174 = vmatprep.subr.bf16.mxu0 0
    %175 = vmatpush2.bf16.msra.mxu0 0
    %176 = vmatprep.subr.bf16.mxu0 0
    %177 = vmatpush2.bf16.msra.mxu0 0
    %178 = vmatprep.subr.bf16.mxu0 0
    %179 = vmatpush2.bf16.msra.mxu0 0
    %180 = vmatprep.subr.bf16.mxu0 0
    %181 = vmatpush2.bf16.msra.mxu0 0
    %182 = vmatprep.subr.bf16.mxu0 0
    %183 = vmatpush2.bf16.msra.mxu0 0
    %184 = vmatprep.subr.bf16.mxu0 0
    %185 = vmatpush2.bf16.msra.mxu0 0
    %186 = vmatprep.subr.bf16.mxu0 0
    %187 = vmatpush2.bf16.msra.mxu0 0
    %188 = vmatprep.subr.bf16.mxu0 0
    %189 = vmatpush2.bf16.msra.mxu0 0
    %190 = vmatprep.mubr.bf16.mxu0 0
    %191 = vmatmul.mubr.bf16.gmra.mxu0 %v153
    %v192 = vpop.f32.mrf.mxu0
    %v193 = vadd.f32 0.0, %v192
    %v194 = vpop.f32.mrf.mxu0
    %v195 = vpop.f32.mrf.mxu0
    %v196 = vpop.f32.mrf.mxu0
    %197 = vdwg.mxu0
    %v199 = vsel %vm151, %v150, 0
    %v201 = vsel %vm155, %v30, 0
    %203 = vmatprep.subr.bf16.mxu0 0
    %204 = vmatpush1.bf16.msra.mxu0 0
    %205 = vmatprep.subr.bf16.mxu0 0
    %206 = vmatpush1.bf16.msra.mxu0 0
    %207 = vmatprep.subr.bf16.mxu0 0
    %208 = vmatpush1.bf16.msra.mxu0 0
    %209 = vmatprep.subr.bf16.mxu0 0
    %210 = vmatpush1.bf16.msra.mxu0 0
    %211 = vmatprep.subr.bf16.mxu0 0
    %212 = vmatpush1.bf16.msra.mxu0 0
    %213 = vmatprep.subr.bf16.mxu0 0
    %214 = vmatpush1.bf16.msra.mxu0 0
    %215 = vmatprep.subr.bf16.mxu0 0
    %216 = vmatpush1.bf16.msra.mxu0 0
    %217 = vmatprep.subr.bf16.mxu0 0
    %218 = vmatpush1.bf16.msra.mxu0 %v201
    %219 = vmatprep.subr.bf16.mxu0 0
    %220 = vmatpush2.bf16.msra.mxu0 0
    %221 = vmatprep.subr.bf16.mxu0 0
    %222 = vmatpush2.bf16.msra.mxu0 0
    %223 = vmatprep.subr.bf16.mxu0 0
    %224 = vmatpush2.bf16.msra.mxu0 0
    %225 = vmatprep.subr.bf16.mxu0 0
    %226 = vmatpush2.bf16.msra.mxu0 0
    %227 = vmatprep.subr.bf16.mxu0 0
    %228 = vmatpush2.bf16.msra.mxu0 0
    %229 = vmatprep.subr.bf16.mxu0 0
    %230 = vmatpush2.bf16.msra.mxu0 0
    %231 = vmatprep.subr.bf16.mxu0 0
    %232 = vmatpush2.bf16.msra.mxu0 0
    %233 = vmatprep.subr.bf16.mxu0 0
    %234 = vmatpush2.bf16.msra.mxu0 0
    %235 = vmatprep.mubr.bf16.mxu0 0
    %236 = vmatmul.mubr.bf16.gmra.mxu0 %v199
    %v237 = vpop.f32.mrf.mxu0
    %v238 = vadd.f32 0.0, %v237
    %v239 = vpop.f32.mrf.mxu0
    %v240 = vpop.f32.mrf.mxu0
    %v241 = vpop.f32.mrf.mxu0
    %242 = vdwg.mxu0
    %v243 = vunpack.c.l.bf16 %v27
    %v244 = vunpack.c.l.bf16 %v28
    %v245 = vadd.f32 %v243, %v193
    %v246 = vadd.f32 %v244, %v238
    %v249 = vlaneseq
    %v250 = vshrl.u32 %v249, 7
    %v251 = vsub.s32 0, %v250
    %v252 = vrot.slane %v245, %v251
    %v253 = vlaneseq
    %v254 = vshrl.u32 %v253, 7
    %v255 = vsub.s32 0, %v254
    %v256 = vrot.slane %v246, %v255
    %vm257 = vcmask 1041409
    %v258 = vsel %vm257, %v256, %v252
    %vm260 = vcmask 254976
    %261 = vst.msk [vmem:[#allocation5] sm:$0x3] %vm260, %v258
    // Predicated region
    $region14: #{tpu_custom_call.1} parent=1 // pred_check
      _
    $region15: #{tpu_custom_call.1} parent=1 // pred_check_branch
      %263 = sbr.rel (0) target = $region17
    $region16: #{tpu_custom_call.1} parent=1 // pred_region
      %s265 = ssub.s32 32, 32
      %266 = vsyncadd [#allocation4], %s265
      %s268 = sshll.u32 [#allocation5], 4
      %s269 = int_to_ptr.vmem [resolvable:$true] %s268
      %271 = dma.vmem_to_hbm [thread:$0]  %s269, 32, %s2, [#allocation4]
    $region17: #{tpu_custom_call.1} parent=1 // pred_fallthru
      _
    // Predicated region
    $region18: #{tpu_custom_call.1} parent=1 // pred_check
      _
    $region19: #{tpu_custom_call.1} parent=1 // pred_check_branch
      %273 = sbr.rel (0) target = $region21
    $region20: #{tpu_custom_call.1} parent=1 // pred_region
      %274 = dma.done [#allocation4], 32
    $region21: #{tpu_custom_call.1} parent=1 // pred_fallthru
      _
    %275 = vsyncpa [#allocation3], 1
    %276 = vsyncpa [#allocation4], 1

</llo_original>
